<compile_context>
chip_gen: v7x
topology: tpu7x:2x2x1
jax: 0.10.0
libtpu: 0.0.40
codegen_flags: <defaults>
</compile_context>

<pallas_src>
import functools
import numpy as np
import jax
import jax.numpy as jnp
from jax.experimental import pallas as pl
from jax.experimental.pallas import tpu as pltpu


_VMEM_LIMIT = 48 * 1024 * 1024  # > v5e 16 MiB scoped default, < v7x 64 MiB phys


# ----------------------------------------------------------------------------
# small helpers (glue)
# ----------------------------------------------------------------------------
def _round_up(x, m):
    return ((x + m - 1) // m) * m


def _largest_divisor(n, cap=8):
    d = min(n, cap)
    while n % d != 0:
        d -= 1
    return d


def _pick_tm(M, cap=512):
    """(TM, Mp): prefer a 16-aligned divisor of M (no padding); else full M;
    else pad M up to a 16-aligned tile."""
    best = 0
    t = 16
    while t <= min(M, cap):
        if M % t == 0:
            best = t
        t += 16
    if best:
        return best, M
    if M <= cap and M % 8 == 0:     # full-dim block: legal even if not 16-aligned
        return M, M
    tm = min(cap, _round_up(M, 16))
    return tm, _round_up(M, tm)


def _pick_tn(Np, cap=256):
    if Np <= 128:
        return Np                    # full-dim lane block (64 or 128)
    tn = cap
    while Np % tn != 0:
        tn -= 128
    return tn


def _pick_tk(Kp, cap=2304):
    if Kp <= cap:
        return Kp                    # single K step for every conv in this net
    tk = (cap // 128) * 128
    while Kp % tk != 0:
        tk -= 128
    return tk


def _im2col(x, kh, kw, stride, padding):
    """x: NHWC -> (N*Ho*Wo, kh*kw*C) patches (only used for 7x7 stem / stride-2 3x3)."""
    N, H, W, C = x.shape
    xp = jnp.pad(x, ((0, 0), (padding, padding), (padding, padding), (0, 0)))
    Ho = (H + 2 * padding - kh) // stride + 1
    Wo = (W + 2 * padding - kw) // stride + 1
    cols = []
    for i in range(kh):
        for j in range(kw):
            cols.append(xp[:, i:i + stride * Ho:stride,
                           j:j + stride * Wo:stride, :])
    patches = jnp.concatenate(cols, axis=-1)
    return patches.reshape(N * Ho * Wo, kh * kw * C), (N, Ho, Wo)


def _flatten_1x1(x, stride):
    """1x1 conv: optional spatial subsample + (free) reshape, no im2col."""
    xs = x[:, ::stride, ::stride, :]
    N, Ho, Wo, C = xs.shape
    return xs.reshape(N * Ho * Wo, C), (N, Ho, Wo)


# ----------------------------------------------------------------------------
# Pallas kernels
# ----------------------------------------------------------------------------
def _matmul_bn_kernel(a_ref, w_ref, b_ref, *rest, relu, has_residual):
    """Tiled matmul (K-accumulate) + bias [+bf16 residual] [+relu] -> bf16 out."""
    if has_residual:
        r_ref, o_ref, acc_ref = rest
    else:
        o_ref, acc_ref = rest
    k = pl.program_id(2)

    @pl.when(k == 0)
    def _():
        acc_ref[...] = jnp.zeros_like(acc_ref)

    acc_ref[...] += jnp.dot(a_ref[...], w_ref[...],
                            preferred_element_type=jnp.float32)

    @pl.when(k == pl.num_programs(2) - 1)
    def _():
        acc = acc_ref[...] + b_ref[...]
        if has_residual:
            acc = acc + r_ref[...].astype(jnp.float32)
        if relu:
            acc = jnp.maximum(acc, 0.0)
        o_ref[...] = acc.astype(o_ref.dtype)


def _conv3x3_gather_kernel(xp_hbm, w_ref, b_ref, o_ref, row_buf, sem,
                           *, TH, Wo, relu):
    """Stride-1 3x3 conv: DMA TH+2 padded input rows from HBM, 9 static tap
    slices -> MXU, bias + relu, bf16 out.  No im2col patch matrix in HBM."""
    n = pl.program_id(1)
    hb = pl.program_id(2)
    rows = TH + 2
    copy_in = pltpu.make_async_copy(
        xp_hbm.at[n, pl.ds(hb * TH, rows)], row_buf, sem.at[0])
    copy_in.start()
    copy_in.wait()
    tn = b_ref.shape[-1]
    for th in range(TH):
        acc = jnp.zeros((Wo, tn), jnp.float32)
        for i in range(3):
            for j in range(3):
                a = row_buf[th + i, j:j + Wo, :]              # (Wo, C) bf16
                acc += jnp.dot(a, w_ref[3 * i + j],           # (C, TN) bf16
                               preferred_element_type=jnp.float32)
        acc = acc + b_ref[...]
        if relu:
            acc = jnp.maximum(acc, 0.0)
        o_ref[0, th] = acc.astype(o_ref.dtype)


def _maxpool_gather_kernel(e_hbm, o_hbm, out_ref, ebuf, obuf, sem, *, TH, Wo):
    """MaxPool 3x3/s2/p1: DMA 2*TH+1 rows of the even/odd-column split of the
    padded input and take the 9-tap max with static slices (single HBM pass)."""
    n = pl.program_id(0)
    hb = pl.program_id(1)
    rows = 2 * TH + 1
    ce = pltpu.make_async_copy(e_hbm.at[n, pl.ds(2 * TH * hb, rows)],
                               ebuf, sem.at[0])
    co = pltpu.make_async_copy(o_hbm.at[n, pl.ds(2 * TH * hb, rows)],
                               obuf, sem.at[1])
    ce.start()
    co.start()
    ce.wait()
    co.wait()
    for th in range(TH):
        r0 = 2 * th
        m = None
        for i in range(3):
            row_m = jnp.maximum(
                jnp.maximum(ebuf[r0 + i, 0:Wo, :], ebuf[r0 + i, 1:Wo + 1, :]),
                obuf[r0 + i, 0:Wo, :])
            m = row_m if m is None else jnp.maximum(m, row_m)
        out_ref[0, th] = m


# ----------------------------------------------------------------------------
# Pallas-backed ops
# ----------------------------------------------------------------------------
def _conv_matmul_pallas(A, dims, cp, *, relu, residual):
    """Shared MXU path for 1x1 convs and wrapper-im2col convs. A: (M, K) bf16."""
    N, Ho, Wo = dims
    M, K = A.shape
    Kp, Np, cout = cp['Kp'], cp['Np'], cp['cout']
    if Kp != K:
        A = jnp.pad(A, ((0, 0), (0, Kp - K)))

    TM, Mp = _pick_tm(M)
    TN = _pick_tn(Np)
    TK = _pick_tk(Kp)
    # v7x has 2 TensorCores sharded over the parallel axes: keep >= 2 blocks.
    if (Mp // TM) * (Np // TN) < 2:
        if TN >= 256:
            TN //= 2
        elif TM % 32 == 0:
            TM //= 2
    if Mp != M:
        A = jnp.pad(A, ((0, Mp - M), (0, 0)))

    args = [A, cp['wmm'], cp['b']]
    in_specs = [
        pl.BlockSpec((TM, TK), lambda j, i, k: (i, k)),
        pl.BlockSpec((TK, TN), lambda j, i, k: (k, j)),
        pl.BlockSpec((1, TN), lambda j, i, k: (0, j)),
    ]
    if residual is not None:
        R = residual.reshape(M, cout)                         # free reshape, bf16
        if (Mp, Np) != (M, cout):
            R = jnp.pad(R, ((0, Mp - M), (0, Np - cout)))
        args.append(R)
        in_specs.append(pl.BlockSpec((TM, TN), lambda j, i, k: (i, j)))

    kernel = functools.partial(_matmul_bn_kernel, relu=relu,
                               has_residual=residual is not None)
    out = pl.pallas_call(
        kernel,
        out_shape=jax.ShapeDtypeStruct((Mp, Np), jnp.bfloat16),
        grid=(Np // TN, Mp // TM, Kp // TK),
        in_specs=in_specs,
        out_specs=pl.BlockSpec((TM, TN), lambda j, i, k: (i, j)),
        scratch_shapes=[pltpu.VMEM((TM, TN), jnp.float32)],
        compiler_params=pltpu.CompilerParams(
            dimension_semantics=("parallel", "parallel", "arbitrary"),
            vmem_limit_bytes=_VMEM_LIMIT),
    )(*args)
    if (Mp, Np) != (M, cout):
        out = out[:M, :cout]
    return out.reshape(N, Ho, Wo, cout)


def _conv3x3_s1_pallas(x, cp, *, relu=True):
    """Stride-1 3x3 conv with in-kernel row gather (no HBM im2col)."""
    N, H, W, C = x.shape
    Ho, Wo = H, W
    Wp = W + 2
    xp = jnp.pad(x, ((0, 0), (1, 1), (1, 1), (0, 0)))         # bf16, ~1x traffic
    Np, cout = cp['Np'], cp['cout']
    TN = _pick_tn(Np)
    TH = _largest_divisor(Ho, cap=8)
    rows = TH + 2

    kernel = functools.partial(_conv3x3_gather_kernel, TH=TH, Wo=Wo, relu=relu)
    out = pl.pallas_call(
        kernel,
        out_shape=jax.ShapeDtypeStruct((N, Ho, Wo, Np), jnp.bfloat16),
        grid=(Np // TN, N, Ho // TH),
        in_specs=[
            pl.BlockSpec(memory_space=pl.ANY),                 # padded input, HBM
            pl.BlockSpec((9, C, TN), lambda j, n, hb: (0, 0, j)),
            pl.BlockSpec((1, TN), lambda j, n, hb: (0, j)),
        ],
        out_specs=pl.BlockSpec((1, TH, Wo, TN), lambda j, n, hb: (n, hb, 0, j)),
        scratch_shapes=[pltpu.VMEM((rows, Wp, C), jnp.bfloat16),
                        pltpu.SemaphoreType.DMA((1,))],
        compiler_params=pltpu.CompilerParams(
            dimension_semantics=("parallel", "parallel", "arbitrary"),
            vmem_limit_bytes=_VMEM_LIMIT),
    )(xp, cp['wtap'], cp['b'])
    if Np != cout:
        out = out[..., :cout]
    return out


def conv_bn_pallas(x, cp, *, relu=True, residual=None):
    """Conv2d (no bias) + folded BatchNorm + optional residual + optional ReLU."""
    if cp['kh'] == 1 and cp['kw'] == 1:
        A, dims = _flatten_1x1(x, cp['stride'])
        return _conv_matmul_pallas(A, dims, cp, relu=relu, residual=residual)
    if cp['kh'] == 3 and cp['stride'] == 1 and 'wtap' in cp:
        assert residual is None
        return _conv3x3_s1_pallas(x, cp, relu=relu)
    # TODO(synk): 7x7 stem / stride-2 3x3 still build im2col patches in HBM.
    A, dims = _im2col(x, cp['kh'], cp['kw'], cp['stride'], cp['padding'])
    return _conv_matmul_pallas(A, dims, cp, relu=relu, residual=residual)


def maxpool_3x3_s2_pallas(x):
    """MaxPool2d(kernel=3, stride=2, padding=1) on NHWC bf16 (H, W even)."""
    N, H, W, C = x.shape
    assert H % 2 == 0 and W % 2 == 0
    Ho, Wo = H // 2, W // 2
    # Input is post-ReLU (>= 0); a large negative pad is semantically safe.
    xp = jnp.pad(x, ((0, 0), (1, 1), (1, 1), (0, 0)), constant_values=-1e30)
    E = xp[:, :, 0::2, :]                                     # (N, H+2, Wo+1, C)
    O = xp[:, :, 1::2, :]                                     # (N, H+2, Wo+1, C)
    TH = _largest_divisor(Ho, cap=8)
    rows = 2 * TH + 1

    kernel = functools.partial(_maxpool_gather_kernel, TH=TH, Wo=Wo)
    return pl.pallas_call(
        kernel,
        out_shape=jax.ShapeDtypeStruct((N, Ho, Wo, C), x.dtype),
        grid=(N, Ho // TH),
        in_specs=[pl.BlockSpec(memory_space=pl.ANY),
                  pl.BlockSpec(memory_space=pl.ANY)],
        out_specs=pl.BlockSpec((1, TH, Wo, C), lambda n, hb: (n, hb, 0, 0)),
        scratch_shapes=[pltpu.VMEM((rows, Wo + 1, C), x.dtype),
                        pltpu.VMEM((rows, Wo + 1, C), x.dtype),
                        pltpu.SemaphoreType.DMA((2,))],
        compiler_params=pltpu.CompilerParams(
            dimension_semantics=("parallel", "arbitrary"),
            vmem_limit_bytes=_VMEM_LIMIT),
    )(E, O)


# ----------------------------------------------------------------------------
# pure-JAX reference (same bf16 quantization / BN fold) for validation
# ----------------------------------------------------------------------------
def conv_bn_ref(x, cp, *, relu=True, residual=None):
    kh, kw, s, p = cp['kh'], cp['kw'], cp['stride'], cp['padding']
    cout = cp['cout']
    xb = x.astype(jnp.bfloat16)
    if kh == 1 and kw == 1:
        A, (N, Ho, Wo) = _flatten_1x1(xb, s)
    else:
        A, (N, Ho, Wo) = _im2col(xb, kh, kw, s, p)
    out = jnp.dot(A, cp['w2d'], preferred_element_type=jnp.float32)
    out = out + cp['b'][0, :cout][None, :]
    if residual is not None:
        out = out + residual.reshape(N * Ho * Wo, cout).astype(jnp.float32)
    if relu:
        out = jnp.maximum(out, 0.0)
    return out.reshape(N, Ho, Wo, cout).astype(jnp.bfloat16)


def maxpool_3x3_s2_ref(x):
    N, H, W, C = x.shape
    Ho, Wo = H // 2, W // 2
    xp = jnp.pad(x, ((0, 0), (1, 1), (1, 1), (0, 0)), constant_values=-1e30)
    m = None
    for i in range(3):
        for j in range(3):
            tap = xp[:, i:i + 2 * Ho:2, j:j + 2 * Wo:2, :]
            m = tap if m is None else jnp.maximum(m, tap)
    return m


# ----------------------------------------------------------------------------
# parameters (deterministic synthetic init, same shapes as resnet50[:-3])
# ----------------------------------------------------------------------------
def _init_conv(key, kh, kw, cin, cout):
    std = (2.0 / (kh * kw * cin)) ** 0.5
    return std * jax.random.normal(key, (kh, kw, cin, cout), jnp.float32)


def _init_bn(key, c, eps=1e-5):
    k1, k2, k3 = jax.random.split(key, 3)
    gamma = 1.0 + 0.1 * jax.random.normal(k1, (c,), jnp.float32)
    beta = 0.1 * jax.random.normal(k2, (c,), jnp.float32)
    mean = 0.1 * jax.random.normal(k3, (c,), jnp.float32)
    var = jnp.ones((c,), jnp.float32)
    scale = gamma / jnp.sqrt(var + eps)        # eval-mode BN -> scale/bias
    bias = beta - mean * scale
    return scale, bias


def _conv_unit(key, kh, kw, cin, cout, stride, padding):
    k1, k2 = jax.random.split(key)
    w = _init_conv(k1, kh, kw, cin, cout)
    scale, bias = _init_bn(k2, cout)
    return {'w': w, 'scale': scale, 'bias': bias,
            'stride': stride, 'padding': padding}


def _make_bottleneck(key, cin, planes, stride, downsample):
    ks = jax.random.split(key, 4)
    blk = {
        'conv1': _conv_unit(ks[0], 1, 1, cin, planes, 1, 0),
        'conv2': _conv_unit(ks[1], 3, 3, planes, planes, stride, 1),
        'conv3': _conv_unit(ks[2], 1, 1, planes, planes * 4, 1, 0),
    }
    if downsample:
        blk['downsample'] = _conv_unit(ks[3], 1, 1, cin, planes * 4, stride, 0)
    return blk


def _make_layer(key, cin, planes, blocks, stride):
    keys = jax.random.split(key, blocks)
    layer = [_make_bottleneck(keys[0], cin, planes, stride, downsample=True)]
    for i in range(1, blocks):
        layer.append(_make_bottleneck(keys[i], planes * 4, planes, 1,
                                      downsample=False))
    return layer


def init_params(key):
    ks = jax.random.split(key, 4)
    return {
        'stem': _conv_unit(ks[0], 7, 7, 3, 64, stride=2, padding=3),
        'layer1': _make_layer(ks[1], 64, 64, 3, 1),
        'layer2': _make_layer(ks[2], 256, 128, 4, 2),
        'layer3': _make_layer(ks[3], 512, 256, 6, 2),
    }


def _prepare_conv(unit):
    """Constant work hoisted out of the forward: fold BN scale into W, cast to
    bf16, pad K (stem only) and build the per-tap weight layout for 3x3/s1."""
    w, scale, bias = unit['w'], unit['scale'], unit['bias']
    kh, kw, cin, cout = w.shape
    K = kh * kw * cin
    Np = cout if (cout < 128 or cout % 128 == 0) else _round_up(cout, 128)
    Kp = K if (K < 128 or K % 128 == 0) else _round_up(K, 128)
    w2d = (w.reshape(K, cout) * scale[None, :]).astype(jnp.bfloat16)
    wmm = w2d
    if (Kp, Np) != (K, cout):
        wmm = jnp.pad(w2d, ((0, Kp - K), (0, Np - cout)))
    b = jnp.pad(bias, (0, Np - cout)).reshape(1, Np).astype(jnp.float32)
    cp = {'w2d': w2d, 'wmm': wmm, 'b': b, 'kh': kh, 'kw': kw, 'cin': cin,
          'cout': cout, 'K': K, 'Kp': Kp, 'Np': Np,
          'stride': unit['stride'], 'padding': unit['padding']}
    if kh == 3 and kw == 3 and unit['stride'] == 1 and Np == cout:
        cp['wtap'] = w2d.reshape(kh * kw, cin, cout)   # (9, C, cout) per-tap
    return cp


def prepare_params(raw):
    out = {'stem': _prepare_conv(raw['stem'])}
    for name in ('layer1', 'layer2', 'layer3'):
        out[name] = [{k: _prepare_conv(v) for k, v in blk.items()}
                     for blk in raw[name]]
    return out


# ----------------------------------------------------------------------------
# forward pass
# ----------------------------------------------------------------------------
def _bottleneck(x, blk, conv_fn):
    identity = x
    out = conv_fn(x, blk['conv1'], relu=True)
    out = conv_fn(out, blk['conv2'], relu=True)
    if 'downsample' in blk:
        identity = conv_fn(x, blk['downsample'], relu=False)
    # conv3 + bn3 + residual add + final relu fused in one kernel call
    out = conv_fn(out, blk['conv3'], relu=True, residual=identity)
    return out


def base_encoder_forward(x_nchw, params, conv_fn, pool_fn):
    x = jnp.transpose(x_nchw, (0, 2, 3, 1)).astype(jnp.bfloat16)  # NCHW->NHWC
    x = conv_fn(x, params['stem'], relu=True)
    x = pool_fn(x)
    for name in ('layer1', 'layer2', 'layer3'):
        for blk in params[name]:
            x = _bottleneck(x, blk, conv_fn)
    return jnp.transpose(x, (0, 3, 1, 2)).astype(jnp.float32)     # NHWC->NCHW


# ----------------------------------------------------------------------------
# main
# ----------------------------------------------------------------------------
if __name__ == "__main__":
    key = jax.random.PRNGKey(0)
    pkey, xkey = jax.random.split(key)
    params = prepare_params(init_params(pkey))

    # PyTorch-style NCHW input (small spatial size: 32x32 -> 2x2 at layer3)
    x = jax.random.normal(xkey, (2, 3, 32, 32), jnp.float32)

    out = base_encoder_forward(x, params, conv_bn_pallas,
                               maxpool_3x3_s2_pallas)
    out = jax.block_until_ready(out)
    assert out.shape == (2, 1024, 2, 2), out.shape
    assert bool(jnp.all(jnp.isfinite(out)))

    # Reference path uses identical bf16-quantized / BN-folded params and bf16
    # inter-layer activations, so the comparison validates the Pallas tiling /
    # in-kernel gathers / fusion rather than the bf16 choice.
    ref = base_encoder_forward(x, params, conv_bn_ref, maxpool_3x3_s2_ref)
    ref = jax.block_until_ready(ref)
    tol = 1e-2 * (float(jnp.max(jnp.abs(ref))) + 1e-6)
    np.testing.assert_allclose(np.asarray(out), np.asarray(ref),
                               rtol=5e-2, atol=tol)

    print("KERNEL_OK")
</pallas_src>

<mosaic_0001>
module attributes {stable_mosaic.version = 11 : i64} {
  func.func @_matmul_bn_kernel(%arg0: i32, %arg1: i32, %arg2: i32, %arg3: memref<256x256xbf16, #tpu.memory_space<vmem>>, %arg4: memref<256x64xbf16, #tpu.memory_space<vmem>>, %arg5: memref<1x64xf32, #tpu.memory_space<vmem>>, %arg6: memref<256x64xbf16, #tpu.memory_space<vmem>>, %arg7: memref<256x64xf32, #tpu.memory_space<vmem>>) attributes {dimension_semantics = [#tpu.dimension_semantics<parallel>, #tpu.dimension_semantics<parallel>, #tpu.dimension_semantics<arbitrary>], iteration_bounds = array<i64: 1, 2, 1>, scalar_prefetch = 0 : i64, scratch_operands = 1 : i64, tpu.core_type = #tpu.core_type<tc>, window_params = [{transform_indices = @transform_0, window_bounds = array<i64: 256, 256>}, {transform_indices = @transform_1, window_bounds = array<i64: 256, 64>}, {transform_indices = @transform_2, window_bounds = array<i64: 1, 64>}, {transform_indices = @transform_3, window_bounds = array<i64: 256, 64>}]} {
    %c0_i32 = arith.constant 0 : i32
    %0 = arith.cmpi eq, %arg2, %c0_i32 : i32
    %1 = arith.extui %0 : i1 to i32
    %c0_i32_0 = arith.constant 0 : i32
    %2 = arith.cmpi ne, %1, %c0_i32_0 : i32
    scf.if %2 {
      %cst_10 = arith.constant 0.000000e+00 : f32
      %12 = vector.broadcast %cst_10 : f32 to vector<256x64xf32>
      %c0_11 = arith.constant 0 : index
      %c0_12 = arith.constant 0 : index
      %13 = vector.load %arg7[%c0_11, %c0_12] : memref<256x64xf32, #tpu.memory_space<vmem>>, vector<256x64xf32>
      tpu.vector_store %arg7[%c0_11, %c0_12], %12 {strides = array<i32>} : memref<256x64xf32, #tpu.memory_space<vmem>>, vector<256x64xf32>,
    } else {
    }
    %c0 = arith.constant 0 : index
    %c0_1 = arith.constant 0 : index
    %3 = vector.load %arg7[%c0, %c0_1] : memref<256x64xf32, #tpu.memory_space<vmem>>, vector<256x64xf32>
    %c0_2 = arith.constant 0 : index
    %c0_3 = arith.constant 0 : index
    %4 = vector.load %arg3[%c0_2, %c0_3] : memref<256x256xbf16, #tpu.memory_space<vmem>>, vector<256x256xbf16>
    %c0_4 = arith.constant 0 : index
    %c0_5 = arith.constant 0 : index
    %5 = vector.load %arg4[%c0_4, %c0_5] : memref<256x64xbf16, #tpu.memory_space<vmem>>, vector<256x64xbf16>
    %cst = arith.constant dense<0.000000e+00> : vector<256x64xf32>
    %6 = tpu.matmul %4, %5, %cst {dimension_numbers = #tpu.dot_dimension_numbers<[1], [0], [0], [1], [0, 0, 1, 1], [], []>} : vector<256x256xbf16>, vector<256x64xbf16>, vector<256x64xf32> -> vector<256x64xf32>
    %7 = arith.addf %3, %6 : vector<256x64xf32>
    %c0_6 = arith.constant 0 : index
    %c0_7 = arith.constant 0 : index
    %8 = vector.load %arg7[%c0_6, %c0_7] : memref<256x64xf32, #tpu.memory_space<vmem>>, vector<256x64xf32>
    tpu.vector_store %arg7[%c0_6, %c0_7], %7 {strides = array<i32>} : memref<256x64xf32, #tpu.memory_space<vmem>>, vector<256x64xf32>,
    %c0_i32_8 = arith.constant 0 : i32
    %9 = arith.cmpi eq, %arg2, %c0_i32_8 : i32
    %10 = arith.extui %9 : i1 to i32
    %c0_i32_9 = arith.constant 0 : i32
    %11 = arith.cmpi ne, %10, %c0_i32_9 : i32
    scf.if %11 {
      %c0_10 = arith.constant 0 : index
      %c0_11 = arith.constant 0 : index
      %12 = vector.load %arg7[%c0_10, %c0_11] : memref<256x64xf32, #tpu.memory_space<vmem>>, vector<256x64xf32>
      %c0_12 = arith.constant 0 : index
      %c0_13 = arith.constant 0 : index
      %13 = vector.load %arg5[%c0_12, %c0_13] : memref<1x64xf32, #tpu.memory_space<vmem>>, vector<1x64xf32>
      %14 = vector.broadcast %13 : vector<1x64xf32> to vector<256x64xf32>
      %15 = arith.addf %12, %14 : vector<256x64xf32>
      %cst_14 = arith.constant 0.000000e+00 : f32
      %16 = vector.broadcast %cst_14 : f32 to vector<256x64xf32>
      %17 = arith.maximumf %15, %16 : vector<256x64xf32>
      %18 = arith.truncf %17 : vector<256x64xf32> to vector<256x64xbf16>
      %c0_15 = arith.constant 0 : index
      %c0_16 = arith.constant 0 : index
      %19 = vector.load %arg6[%c0_15, %c0_16] : memref<256x64xbf16, #tpu.memory_space<vmem>>, vector<256x64xbf16>
      tpu.vector_store %arg6[%c0_15, %c0_16], %18 {strides = array<i32>} : memref<256x64xbf16, #tpu.memory_space<vmem>>, vector<256x64xbf16>,
    } else {
    }
    return
  }
  func.func @transform_0(%arg0: i32, %arg1: i32, %arg2: i32) -> (i32, i32) {
    %c0_i32 = arith.constant 0 : i32
    return %arg1, %arg2 : i32, i32
  }
  func.func @transform_1(%arg0: i32, %arg1: i32, %arg2: i32) -> (i32, i32) {
    %c0_i32 = arith.constant 0 : i32
    return %arg2, %arg0 : i32, i32
  }
  func.func @transform_2(%arg0: i32, %arg1: i32, %arg2: i32) -> (i32, i32) {
    %c0_i32 = arith.constant 0 : i32
    %c0_i32_0 = arith.constant 0 : i32
    return %c0_i32, %arg0 : i32, i32
  }
  func.func @transform_3(%arg0: i32, %arg1: i32, %arg2: i32) -> (i32, i32) {
    %c0_i32 = arith.constant 0 : i32
    return %arg1, %arg0 : i32, i32
  }
}

</mosaic_0001>

<llo_original>
// kernel: tpu_custom_call.1
$region0: #{tpu_custom_call.1}
  #allocation0 [shape = 'u32[]', space=smem, size = 0x4, offset = 0x4, fixed_abs, tag = 'smem constant byte address 0x4 - core index']
  #allocation1 [shape = 'u32[144,128]{1,0:T(1,128)}', space=vmem, size = 0x12000, scoped, tag = 'internal scratch']
  #allocation2 [shape = 'f32[256,64]{1,0:T(8,128)}', space=vmem, size = 0x20000, scoped, tag = 'scratch operand']
  %s0 = inlined_call_operand.hbm [shape: bf16[512,256], index: 0, kind: input, shape index: {}]
  %s1 = inlined_call_operand.vmem [shape: bf16[256,64], index: 1, kind: input, shape index: {}]
  %s2 = inlined_call_operand.vmem [shape: f32[1,64], index: 2, kind: input, shape index: {}]
  %s3 = inlined_call_operand.vmem [shape: bf16[512,64], index: 3, kind: output, shape index: {}]
  %s4 = sld [smem:[#allocation0]]
  $region57: #{tpu_custom_call.1} parent=0
    _
  %s6 = ssub.s32 1, %s4
  %s7 = scalar_select 0, %s6, %s4
  $region1: #{tpu_custom_call.1} parent=0
    #allocation3 [shape = 'u8[262144]{0}', space=vmem, size = 0x40000, scoped, tag = 'input window, operand 0']
    #allocation4 [shape = 's32[2]{0}', space=sflag, size = 0x8, scoped, tag = 'scoped memory for tpu_custom_call.1']
    %8 = vsyncpa [#allocation4], 0
    %s9 = scalar_lea.sflag [#allocation4], 1
    %10 = vsyncpa %s9, 0
    loop: start=0, step=1, limit=4
    $region2: #{tpu_custom_call.1} parent=1 // loop_pre_header
      _
    $region3: #{tpu_custom_call.1} parent=1 // loop_header
      %s12 = sphi 0, %s16
      %p13 = scmp.ge.s32.totalorder %s12, 4
      %s19 = sphi 0, %s38
      %s20 = sphi 0, %s34
      %s21 = sphi 0, %s30
      %s22 = sphi 0, %s19
      %s23 = sphi 0, %s20
      %s24 = sphi 0, %s21
      %s25 = sphi 0, %s22
      %s26 = sphi 0, %s23
      %s27 = sphi 0, %s24
      %s43 = sphi 0, %s45
      %s46 = sphi 0, %s43
      %s47 = sphi 0, %s46
      %s63 = sphi 0, %s47
      %s71 = sphi 0, %s73
      %s74 = sphi 0, %s71
      %s75 = sphi 0, %s74
      %s91 = sphi 0, %s75
      %s97 = sphi 0, %s99
      %s100 = sphi 0, %s97
      %s101 = sphi 0, %s100
      %s117 = sphi 0, %s101
      %s125 = sphi 0, %s127
      %s128 = sphi 0, %s125
      %s129 = sphi 0, %s128
      %s145 = sphi 0, %s129
    $region4: #{tpu_custom_call.1} parent=1 // loop_header_branch
      %15 = sbr.rel (%p13) target = $region8
    $region5: #{tpu_custom_call.1} parent=1 // loop_body
      %s17 = ssub.s32 %s12, 1
      %s18 = ssub.s32 %s12, 2
      %s28 = sadd.s32 1, %s21
      %p29 = scmp.ge.s32.totalorder %s28, 1
      %s30 = scalar_select %p29, 0, %s28
      %s31 = sadd.s32 1, %s20
      %s32 = scalar_select %p29, %s31, %s20
      %p33 = scmp.ge.s32.totalorder %s32, 2
      %s34 = scalar_select %p33, 0, %s32
      %s35 = sadd.s32 1, %s19
      %s36 = scalar_select %p33, %s35, %s19
      %p37 = scmp.ge.s32.totalorder %s36, 1
      %s38 = scalar_select %p37, 0, %s36
      %s39 = ssub.s32 %s20, %s34
      %s40 = ssub.s32 %s21, %s30
      %s41 = sor.u32 %s39, %s40
      %p42 = scmp.eq.s32.totalorder %s41, 0
      %s44 = sadd.s32 %s43, 1
      %s45 = scalar_select %p42, %s43, %s44
      %p48 = pneg %p42
      %p49 = scmp.eq.s32.totalorder %s12, 1
      %p50 = por %p48, %p49
      %p51 = scmp.ne.s32.totalorder %s43, %s46
      %p52 = scmp.eq.s32.totalorder %s12, 0
      %p53 = por %p51, %p52
      %p54 = scmp.ne.s32.totalorder %s43, %s46
      %p55 = scmp.eq.s32.totalorder %s17, 1
      %p56 = por %p54, %p55
      %p57 = scmp.ne.s32.totalorder %s46, %s47
      %p58 = scmp.eq.s32.totalorder %s17, 0
      %p59 = por %p57, %p58
      %p60 = scmp.ne.s32.totalorder %s46, %s47
      %p61 = scmp.eq.s32.totalorder %s18, 1
      %p62 = por %p60, %p61
      %p64 = scmp.ne.s32.totalorder %s47, %s63
      %p65 = scmp.eq.s32.totalorder %s18, 0
      %p66 = por %p64, %p65
      %s67 = ssub.s32 %s21, %s30
      %s68 = ssub.s32 %s19, %s38
      %s69 = sor.u32 %s67, %s68
      %p70 = scmp.eq.s32.totalorder %s69, 0
      %s72 = sadd.s32 %s71, 1
      %s73 = scalar_select %p70, %s71, %s72
      %p76 = pneg %p70
      %p77 = scmp.eq.s32.totalorder %s12, 1
      %p78 = por %p76, %p77
      %p79 = scmp.ne.s32.totalorder %s71, %s74
      %p80 = scmp.eq.s32.totalorder %s12, 0
      %p81 = por %p79, %p80
      %p82 = scmp.ne.s32.totalorder %s71, %s74
      %p83 = scmp.eq.s32.totalorder %s17, 1
      %p84 = por %p82, %p83
      %p85 = scmp.ne.s32.totalorder %s74, %s75
      %p86 = scmp.eq.s32.totalorder %s17, 0
      %p87 = por %p85, %p86
      %p88 = scmp.ne.s32.totalorder %s74, %s75
      %p89 = scmp.eq.s32.totalorder %s18, 1
      %p90 = por %p88, %p89
      %p92 = scmp.ne.s32.totalorder %s75, %s91
      %p93 = scmp.eq.s32.totalorder %s18, 0
      %p94 = por %p92, %p93
      %s95 = ssub.s32 %s19, %s38
      %p96 = scmp.eq.s32.totalorder %s95, 0
      %s98 = sadd.s32 %s97, 1
      %s99 = scalar_select %p96, %s97, %s98
      %p102 = pneg %p96
      %p103 = scmp.eq.s32.totalorder %s12, 1
      %p104 = por %p102, %p103
      %p105 = scmp.ne.s32.totalorder %s97, %s100
      %p106 = scmp.eq.s32.totalorder %s12, 0
      %p107 = por %p105, %p106
      %p108 = scmp.ne.s32.totalorder %s97, %s100
      %p109 = scmp.eq.s32.totalorder %s17, 1
      %p110 = por %p108, %p109
      %p111 = scmp.ne.s32.totalorder %s100, %s101
      %p112 = scmp.eq.s32.totalorder %s17, 0
      %p113 = por %p111, %p112
      %p114 = scmp.ne.s32.totalorder %s100, %s101
      %p115 = scmp.eq.s32.totalorder %s18, 1
      %p116 = por %p114, %p115
      %p118 = scmp.ne.s32.totalorder %s101, %s117
      %p119 = scmp.eq.s32.totalorder %s18, 0
      %p120 = por %p118, %p119
      %s121 = ssub.s32 %s20, %s34
      %s122 = ssub.s32 %s19, %s38
      %s123 = sor.u32 %s121, %s122
      %p124 = scmp.eq.s32.totalorder %s123, 0
      %s126 = sadd.s32 %s125, 1
      %s127 = scalar_select %p124, %s125, %s126
      %p130 = pneg %p124
      %p131 = scmp.eq.s32.totalorder %s12, 1
      %p132 = por %p130, %p131
      %p133 = scmp.ne.s32.totalorder %s125, %s128
      %p134 = scmp.eq.s32.totalorder %s12, 0
      %p135 = por %p133, %p134
      %p136 = scmp.ne.s32.totalorder %s125, %s128
      %p137 = scmp.eq.s32.totalorder %s17, 1
      %p138 = por %p136, %p137
      %p139 = scmp.ne.s32.totalorder %s128, %s129
      %p140 = scmp.eq.s32.totalorder %s17, 0
      %p141 = por %p139, %p140
      %p142 = scmp.ne.s32.totalorder %s128, %s129
      %p143 = scmp.eq.s32.totalorder %s18, 1
      %p144 = por %p142, %p143
      %p146 = scmp.ne.s32.totalorder %s129, %s145
      %p147 = scmp.eq.s32.totalorder %s18, 0
      %p148 = por %p146, %p147
      %p149 = scmp.le.s32.totalorder 1, %s12
      %p150 = scmp.lt.s32.totalorder %s12, 3
      %p151 = pnand %p149, %p150
      %p152 = pneg %p151
      // Predicated region
      $region9: #{tpu_custom_call.1} parent=5 // pred_check
        _
      $region10: #{tpu_custom_call.1} parent=5 // pred_check_branch
        %154 = sbr.rel (%p151) target = $region12
      $region11: #{tpu_custom_call.1} parent=5 // pred_region
        %s155 = ssub.s32 %s12, 1
        // Predicated region
        $region13: #{tpu_custom_call.1} parent=11 // pred_check
          %p156 = pneg %p87
        $region14: #{tpu_custom_call.1} parent=11 // pred_check_branch
          %158 = sbr.rel (%p156) target = $region16
        $region15: #{tpu_custom_call.1} parent=11 // pred_region
          %s159 = smul.u32 32, %s24
          %p160 = scmp.lt.s32.totalorder %s159, 31
          %s161 = scalar_select %p160, %s159, 31
          %p162 = scmp.lt.s32.totalorder %s22, 0
          %s163 = scalar_select %p162, %s22, 0
          %s164 = sadd.s32 %s163, %s161
          %s165 = smul.addr %s164, 4
          %s166 = scalar_lea.vmem %s1, %s165
          %s167 = smul.u32 32, %s24
        $region16: #{tpu_custom_call.1} parent=11 // pred_fallthru
          _
        // Predicated region
        $region17: #{tpu_custom_call.1} parent=11 // pred_check
          %p168 = pneg %p113
        $region18: #{tpu_custom_call.1} parent=11 // pred_check_branch
          %170 = sbr.rel (%p168) target = $region20
        $region19: #{tpu_custom_call.1} parent=11 // pred_region
          %p171 = scmp.lt.s32.totalorder %s22, 0
          %s172 = scalar_select %p171, %s22, 0
          %s173 = scalar_lea.vmem %s2, %s172
        $region20: #{tpu_custom_call.1} parent=11 // pred_fallthru
          _
      $region12: #{tpu_custom_call.1} parent=5 // pred_fallthru
        _
      %p174 = scmp.lt.s32.totalorder %s12, 2
      // Predicated region
      $region21: #{tpu_custom_call.1} parent=5 // pred_check
        %p175 = pneg %p174
      $region22: #{tpu_custom_call.1} parent=5 // pred_check_branch
        %177 = sbr.rel (%p175) target = $region24
      $region23: #{tpu_custom_call.1} parent=5 // pred_region
        // Predicated region
        $region25: #{tpu_custom_call.1} parent=23 // pred_check
          %p178 = pneg %p53
        $region26: #{tpu_custom_call.1} parent=23 // pred_check_branch
          %180 = sbr.rel (%p178) target = $region28
        $region27: #{tpu_custom_call.1} parent=23 // pred_region
          %s181 = sand.u32 %s43, 1
          %s182 = scalar_lea.sflag [#allocation4], %s181
          %s183 = sand.u32 %s43, 1
          %s184 = smul.addr %s183, 256
          %s185 = scalar_lea.vmem [#allocation3], %s184
          %s186 = smul.u32 32, %s20
          %s187 = smul.u32 2, %s21
          %s189 = ssub.s32 4096, 4096
          %190 = vsyncadd %s182, %s189
          %s191 = smul.addr %s186, 2
          %s192 = sadd.s32 %s187, %s191
          %s193 = smul.addr %s192, 64
          %s194 = scalar_lea.hbm %s0, %s193
          %s195 = sshll.u32 %s185, 4
          %s196 = int_to_ptr.vmem [resolvable:$true] %s195
          %201 = dma.hbm_to_vmem [thread:$0]  %s194, 4096, %s196, %s182, 128, 128, 8
        $region28: #{tpu_custom_call.1} parent=23 // pred_fallthru
          _
      $region24: #{tpu_custom_call.1} parent=5 // pred_fallthru
        _
      %p202 = scmp.le.s32.totalorder 1, %s12
      %p203 = scmp.lt.s32.totalorder %s12, 3
      %p204 = pnand %p202, %p203
      %p205 = pneg %p204
      // Predicated region
      $region29: #{tpu_custom_call.1} parent=5 // pred_check
        _
      $region30: #{tpu_custom_call.1} parent=5 // pred_check_branch
        %207 = sbr.rel (%p204) target = $region32
      $region31: #{tpu_custom_call.1} parent=5 // pred_region
        %s208 = ssub.s32 %s12, 1
        %s209 = sand.u32 %s46, 1
        %s210 = scalar_lea.sflag [#allocation4], %s209
        %s211 = sand.u32 %s46, 1
        %s212 = smul.addr %s211, 256
        %s213 = scalar_lea.vmem [#allocation3], %s212
        // Predicated region
        $region33: #{tpu_custom_call.1} parent=31 // pred_check
          %p214 = pneg %p59
        $region34: #{tpu_custom_call.1} parent=31 // pred_check_branch
          %216 = sbr.rel (%p214) target = $region36
        $region35: #{tpu_custom_call.1} parent=31 // pred_region
          %217 = dma.done %s210, 4096
        $region36: #{tpu_custom_call.1} parent=31 // pred_fallthru
          _
        %s218 = sand.u32 %s46, 1
        %s219 = scalar_lea.sflag [#allocation4], %s218
        %s220 = sand.u32 %s46, 1
        %s221 = smul.addr %s220, 256
        %s222 = scalar_lea.vmem [#allocation3], %s221
        %p223 = pneg %p59
        %p224 = pneg %p56
        %s225 = smul.u32 32, %s24
        %p226 = scmp.lt.s32.totalorder %s225, 31
        %s227 = scalar_select %p226, %s225, 31
        %p228 = scmp.lt.s32.totalorder %s22, 0
        %s229 = scalar_select %p228, %s22, 0
        %s230 = sadd.s32 %s229, %s227
        %s231 = smul.addr %s230, 4
        %s232 = scalar_lea.vmem %s1, %s231
        %p233 = pneg %p87
        %p234 = pneg %p84
        %p235 = scmp.lt.s32.totalorder %s22, 0
        %s236 = scalar_select %p235, %s22, 0
        %s237 = scalar_lea.vmem %s2, %s236
        %p238 = pneg %p113
        %p239 = pneg %p110
        %p240 = pneg %p141
        %p241 = pneg %p138
        %s242 = smul.u32 32, %s23
        %p243 = scmp.lt.s32.totalorder %s242, 63
        %s244 = scalar_select %p243, %s242, 63
        %p245 = scmp.lt.s32.totalorder %s22, 0
        %s246 = scalar_select %p245, %s22, 0
        %s247 = sadd.s32 %s246, %s244
        %s248 = smul.addr %s247, 4
        %s249 = scalar_lea.vmem %s3, %s248
        %s250 = smul.u32 32, %s23
        %s251 = smul.u32 2, %s24
        %s252 = smul.u32 32, %s24
        %p253 = scmp.lt.s32.totalorder %s252, 31
        %s254 = scalar_select %p253, %s252, 31
        %p255 = scmp.lt.s32.totalorder %s22, 0
        %s256 = scalar_select %p255, %s22, 0
        %s257 = sadd.s32 %s256, %s254
        %s258 = smul.addr %s257, 4
        %s259 = scalar_lea.vmem %s1, %s258
        %s260 = smul.u32 32, %s24
        %p261 = scmp.lt.s32.totalorder %s22, 0
        %s262 = scalar_select %p261, %s22, 0
        %s263 = scalar_lea.vmem %s2, %s262
        %s264 = smul.u32 32, %s23
        %p265 = scmp.lt.s32.totalorder %s264, 63
        %s266 = scalar_select %p265, %s264, 63
        %p267 = scmp.lt.s32.totalorder %s22, 0
        %s268 = scalar_select %p267, %s22, 0
        %s269 = sadd.s32 %s268, %s266
        %s270 = smul.addr %s269, 4
        %s271 = scalar_lea.vmem %s3, %s270
        %s272 = smul.u32 32, %s23
        %p274 = scmp.eq.s32.totalorder %s24, 0
        // Predicated region
        $region37: #{tpu_custom_call.1} parent=31 // pred_check
          %p275 = pneg %p274
        $region38: #{tpu_custom_call.1} parent=31 // pred_check_branch
          %277 = sbr.rel (%p275) target = $region40
        $region39: #{tpu_custom_call.1} parent=31 // pred_region
          %vm278 = vcmask 523264
          %279 = vst.msk [vmem:[#allocation2] sm:$0xff] %vm278, 0.0
          %280 = vst.msk [vmem:[#allocation2 + $0x8] sm:$0xff] %vm278, 0.0
          %281 = vst.msk [vmem:[#allocation2 + $0x10] sm:$0xff] %vm278, 0.0
          %282 = vst.msk [vmem:[#allocation2 + $0x18] sm:$0xff] %vm278, 0.0
          %283 = vst.msk [vmem:[#allocation2 + $0x20] sm:$0xff] %vm278, 0.0
          %284 = vst.msk [vmem:[#allocation2 + $0x28] sm:$0xff] %vm278, 0.0
          %285 = vst.msk [vmem:[#allocation2 + $0x30] sm:$0xff] %vm278, 0.0
          %286 = vst.msk [vmem:[#allocation2 + $0x38] sm:$0xff] %vm278, 0.0
          %287 = vst.msk [vmem:[#allocation2 + $0x40] sm:$0xff] %vm278, 0.0
          %288 = vst.msk [vmem:[#allocation2 + $0x48] sm:$0xff] %vm278, 0.0
          %289 = vst.msk [vmem:[#allocation2 + $0x50] sm:$0xff] %vm278, 0.0
          %290 = vst.msk [vmem:[#allocation2 + $0x58] sm:$0xff] %vm278, 0.0
          %291 = vst.msk [vmem:[#allocation2 + $0x60] sm:$0xff] %vm278, 0.0
          %292 = vst.msk [vmem:[#allocation2 + $0x68] sm:$0xff] %vm278, 0.0
          %293 = vst.msk [vmem:[#allocation2 + $0x70] sm:$0xff] %vm278, 0.0
          %294 = vst.msk [vmem:[#allocation2 + $0x78] sm:$0xff] %vm278, 0.0
          %295 = vst.msk [vmem:[#allocation2 + $0x80] sm:$0xff] %vm278, 0.0
          %296 = vst.msk [vmem:[#allocation2 + $0x88] sm:$0xff] %vm278, 0.0
          %297 = vst.msk [vmem:[#allocation2 + $0x90] sm:$0xff] %vm278, 0.0
          %298 = vst.msk [vmem:[#allocation2 + $0x98] sm:$0xff] %vm278, 0.0
          %299 = vst.msk [vmem:[#allocation2 + $0xa0] sm:$0xff] %vm278, 0.0
          %300 = vst.msk [vmem:[#allocation2 + $0xa8] sm:$0xff] %vm278, 0.0
          %301 = vst.msk [vmem:[#allocation2 + $0xb0] sm:$0xff] %vm278, 0.0
          %302 = vst.msk [vmem:[#allocation2 + $0xb8] sm:$0xff] %vm278, 0.0
          %303 = vst.msk [vmem:[#allocation2 + $0xc0] sm:$0xff] %vm278, 0.0
          %304 = vst.msk [vmem:[#allocation2 + $0xc8] sm:$0xff] %vm278, 0.0
          %305 = vst.msk [vmem:[#allocation2 + $0xd0] sm:$0xff] %vm278, 0.0
          %306 = vst.msk [vmem:[#allocation2 + $0xd8] sm:$0xff] %vm278, 0.0
          %307 = vst.msk [vmem:[#allocation2 + $0xe0] sm:$0xff] %vm278, 0.0
          %308 = vst.msk [vmem:[#allocation2 + $0xe8] sm:$0xff] %vm278, 0.0
          %309 = vst.msk [vmem:[#allocation2 + $0xf0] sm:$0xff] %vm278, 0.0
          %310 = vst.msk [vmem:[#allocation2 + $0xf8] sm:$0xff] %vm278, 0.0
        $region40: #{tpu_custom_call.1} parent=31 // pred_fallthru
          _
        %v311 = vld [vmem:[#allocation2] sm:$0xff]
        %v312 = vld [vmem:[#allocation2 + $0x8] sm:$0xff]
        %v313 = vld [vmem:[#allocation2 + $0x10] sm:$0xff]
        %v314 = vld [vmem:[#allocation2 + $0x18] sm:$0xff]
        %v315 = vld [vmem:[#allocation2 + $0x20] sm:$0xff]
        %v316 = vld [vmem:[#allocation2 + $0x28] sm:$0xff]
        %v317 = vld [vmem:[#allocation2 + $0x30] sm:$0xff]
        %v318 = vld [vmem:[#allocation2 + $0x38] sm:$0xff]
        %v319 = vld [vmem:[#allocation2 + $0x40] sm:$0xff]
        %v320 = vld [vmem:[#allocation2 + $0x48] sm:$0xff]
        %v321 = vld [vmem:[#allocation2 + $0x50] sm:$0xff]
        %v322 = vld [vmem:[#allocation2 + $0x58] sm:$0xff]
        %v323 = vld [vmem:[#allocation2 + $0x60] sm:$0xff]
        %v324 = vld [vmem:[#allocation2 + $0x68] sm:$0xff]
        %v325 = vld [vmem:[#allocation2 + $0x70] sm:$0xff]
        %v326 = vld [vmem:[#allocation2 + $0x78] sm:$0xff]
        %v327 = vld [vmem:[#allocation2 + $0x80] sm:$0xff]
        %v328 = vld [vmem:[#allocation2 + $0x88] sm:$0xff]
        %v329 = vld [vmem:[#allocation2 + $0x90] sm:$0xff]
        %v330 = vld [vmem:[#allocation2 + $0x98] sm:$0xff]
        %v331 = vld [vmem:[#allocation2 + $0xa0] sm:$0xff]
        %v332 = vld [vmem:[#allocation2 + $0xa8] sm:$0xff]
        %v333 = vld [vmem:[#allocation2 + $0xb0] sm:$0xff]
        %v334 = vld [vmem:[#allocation2 + $0xb8] sm:$0xff]
        %v335 = vld [vmem:[#allocation2 + $0xc0] sm:$0xff]
        %v336 = vld [vmem:[#allocation2 + $0xc8] sm:$0xff]
        %v337 = vld [vmem:[#allocation2 + $0xd0] sm:$0xff]
        %v338 = vld [vmem:[#allocation2 + $0xd8] sm:$0xff]
        %v339 = vld [vmem:[#allocation2 + $0xe0] sm:$0xff]
        %v340 = vld [vmem:[#allocation2 + $0xe8] sm:$0xff]
        %v341 = vld [vmem:[#allocation2 + $0xf0] sm:$0xff]
        %v342 = vld [vmem:[#allocation2 + $0xf8] sm:$0xff]
        %v343 = vld [vmem:[%s213] sm:$0xff]
        %v344 = vld [vmem:[%s213 + $0x8] sm:$0xff]
        %v345 = vld [vmem:[%s213 + $0x10] sm:$0xff]
        %v346 = vld [vmem:[%s213 + $0x18] sm:$0xff]
        %v347 = vld [vmem:[%s213 + $0x20] sm:$0xff]
        %v348 = vld [vmem:[%s213 + $0x28] sm:$0xff]
        %v349 = vld [vmem:[%s213 + $0x30] sm:$0xff]
        %v350 = vld [vmem:[%s213 + $0x38] sm:$0xff]
        %v351 = vld [vmem:[%s213 + $0x40] sm:$0xff]
        %v352 = vld [vmem:[%s213 + $0x48] sm:$0xff]
        %v353 = vld [vmem:[%s213 + $0x50] sm:$0xff]
        %v354 = vld [vmem:[%s213 + $0x58] sm:$0xff]
        %v355 = vld [vmem:[%s213 + $0x60] sm:$0xff]
        %v356 = vld [vmem:[%s213 + $0x68] sm:$0xff]
        %v357 = vld [vmem:[%s213 + $0x70] sm:$0xff]
        %v358 = vld [vmem:[%s213 + $0x78] sm:$0xff]
        %v359 = vld [vmem:[%s213 + $0x80] sm:$0xff]
        %v360 = vld [vmem:[%s213 + $0x88] sm:$0xff]
        %v361 = vld [vmem:[%s213 + $0x90] sm:$0xff]
        %v362 = vld [vmem:[%s213 + $0x98] sm:$0xff]
        %v363 = vld [vmem:[%s213 + $0xa0] sm:$0xff]
        %v364 = vld [vmem:[%s213 + $0xa8] sm:$0xff]
        %v365 = vld [vmem:[%s213 + $0xb0] sm:$0xff]
        %v366 = vld [vmem:[%s213 + $0xb8] sm:$0xff]
        %v367 = vld [vmem:[%s213 + $0xc0] sm:$0xff]
        %v368 = vld [vmem:[%s213 + $0xc8] sm:$0xff]
        %v369 = vld [vmem:[%s213 + $0xd0] sm:$0xff]
        %v370 = vld [vmem:[%s213 + $0xd8] sm:$0xff]
        %v371 = vld [vmem:[%s213 + $0xe0] sm:$0xff]
        %v372 = vld [vmem:[%s213 + $0xe8] sm:$0xff]
        %v373 = vld [vmem:[%s213 + $0xf0] sm:$0xff]
        %v374 = vld [vmem:[%s213 + $0xf8] sm:$0xff]
        %v375 = vld [vmem:[%s259] sm:$0xf]
        %v376 = vld [vmem:[%s259 + $0x4] sm:$0xf]
        %v377 = vld [vmem:[%s259 + $0x8] sm:$0xf]
        %v378 = vld [vmem:[%s259 + $0xc] sm:$0xf]
        %v379 = vld [vmem:[%s259 + $0x10] sm:$0xf]
        %v380 = vld [vmem:[%s259 + $0x14] sm:$0xf]
        %v381 = vld [vmem:[%s259 + $0x18] sm:$0xf]
        %v382 = vld [vmem:[%s259 + $0x1c] sm:$0xf]
        %v383 = vld [vmem:[%s259 + $0x20] sm:$0xf]
        %v384 = vld [vmem:[%s259 + $0x24] sm:$0xf]
        %v385 = vld [vmem:[%s259 + $0x28] sm:$0xf]
        %v386 = vld [vmem:[%s259 + $0x2c] sm:$0xf]
        %v387 = vld [vmem:[%s259 + $0x30] sm:$0xf]
        %v388 = vld [vmem:[%s259 + $0x34] sm:$0xf]
        %v389 = vld [vmem:[%s259 + $0x38] sm:$0xf]
        %v390 = vld [vmem:[%s259 + $0x3c] sm:$0xf]
        %v391 = vld [vmem:[%s259 + $0x40] sm:$0xf]
        %v392 = vld [vmem:[%s259 + $0x44] sm:$0xf]
        %v393 = vld [vmem:[%s259 + $0x48] sm:$0xf]
        %v394 = vld [vmem:[%s259 + $0x4c] sm:$0xf]
        %v395 = vld [vmem:[%s259 + $0x50] sm:$0xf]
        %v396 = vld [vmem:[%s259 + $0x54] sm:$0xf]
        %v397 = vld [vmem:[%s259 + $0x58] sm:$0xf]
        %v398 = vld [vmem:[%s259 + $0x5c] sm:$0xf]
        %v399 = vld [vmem:[%s259 + $0x60] sm:$0xf]
        %v400 = vld [vmem:[%s259 + $0x64] sm:$0xf]
        %v401 = vld [vmem:[%s259 + $0x68] sm:$0xf]
        %v402 = vld [vmem:[%s259 + $0x6c] sm:$0xf]
        %v403 = vld [vmem:[%s259 + $0x70] sm:$0xf]
        %v404 = vld [vmem:[%s259 + $0x74] sm:$0xf]
        %v405 = vld [vmem:[%s259 + $0x78] sm:$0xf]
        %v406 = vld [vmem:[%s259 + $0x7c] sm:$0xf]
        %v439 = vunpack.c.l.b16 %v343
        %v440 = vunpack.c.h.b16 %v343
        %v441 = vunpack.c.l.b16 %v344
        %v442 = vunpack.c.h.b16 %v344
        %v443 = vunpack.c.l.b16 %v345
        %v444 = vunpack.c.h.b16 %v345
        %v445 = vunpack.c.l.b16 %v346
        %v446 = vunpack.c.h.b16 %v346
        %v447 = vunpack.c.l.b16 %v347
        %v448 = vunpack.c.h.b16 %v347
        %v449 = vunpack.c.l.b16 %v348
        %v450 = vunpack.c.h.b16 %v348
        %v451 = vunpack.c.l.b16 %v349
        %v452 = vunpack.c.h.b16 %v349
        %v453 = vunpack.c.l.b16 %v350
        %v454 = vunpack.c.h.b16 %v350
        %v455 = vunpack.c.l.b16 %v351
        %v456 = vunpack.c.h.b16 %v351
        %v457 = vunpack.c.l.b16 %v352
        %v458 = vunpack.c.h.b16 %v352
        %v459 = vunpack.c.l.b16 %v353
        %v460 = vunpack.c.h.b16 %v353
        %v461 = vunpack.c.l.b16 %v354
        %v462 = vunpack.c.h.b16 %v354
        %v463 = vunpack.c.l.b16 %v355
        %v464 = vunpack.c.h.b16 %v355
        %v465 = vunpack.c.l.b16 %v356
        %v466 = vunpack.c.h.b16 %v356
        %v467 = vunpack.c.l.b16 %v357
        %v468 = vunpack.c.h.b16 %v357
        %v469 = vunpack.c.l.b16 %v358
        %v470 = vunpack.c.h.b16 %v358
        %v471 = vunpack.c.l.b16 %v359
        %v472 = vunpack.c.h.b16 %v359
        %v473 = vunpack.c.l.b16 %v360
        %v474 = vunpack.c.h.b16 %v360
        %v475 = vunpack.c.l.b16 %v361
        %v476 = vunpack.c.h.b16 %v361
        %v477 = vunpack.c.l.b16 %v362
        %v478 = vunpack.c.h.b16 %v362
        %v479 = vunpack.c.l.b16 %v363
        %v480 = vunpack.c.h.b16 %v363
        %v481 = vunpack.c.l.b16 %v364
        %v482 = vunpack.c.h.b16 %v364
        %v483 = vunpack.c.l.b16 %v365
        %v484 = vunpack.c.h.b16 %v365
        %v485 = vunpack.c.l.b16 %v366
        %v486 = vunpack.c.h.b16 %v366
        %v487 = vunpack.c.l.b16 %v367
        %v488 = vunpack.c.h.b16 %v367
        %v489 = vunpack.c.l.b16 %v368
        %v490 = vunpack.c.h.b16 %v368
        %v491 = vunpack.c.l.b16 %v369
        %v492 = vunpack.c.h.b16 %v369
        %v493 = vunpack.c.l.b16 %v370
        %v494 = vunpack.c.h.b16 %v370
        %v495 = vunpack.c.l.b16 %v371
        %v496 = vunpack.c.h.b16 %v371
        %v497 = vunpack.c.l.b16 %v372
        %v498 = vunpack.c.h.b16 %v372
        %v499 = vunpack.c.l.b16 %v373
        %v500 = vunpack.c.h.b16 %v373
        %v501 = vunpack.c.l.b16 %v374
        %v502 = vunpack.c.h.b16 %v374
        %v503 = vpack.c.b16 %v441, %v439
        %v504 = vpack.c.b16 %v442, %v440
        %v505 = vpack.c.b16 %v445, %v443
        %v506 = vpack.c.b16 %v446, %v444
        %v507 = vpack.c.b16 %v449, %v447
        %v508 = vpack.c.b16 %v450, %v448
        %v509 = vpack.c.b16 %v453, %v451
        %v510 = vpack.c.b16 %v454, %v452
        %v511 = vpack.c.b16 %v457, %v455
        %v512 = vpack.c.b16 %v458, %v456
        %v513 = vpack.c.b16 %v461, %v459
        %v514 = vpack.c.b16 %v462, %v460
        %v515 = vpack.c.b16 %v465, %v463
        %v516 = vpack.c.b16 %v466, %v464
        %v517 = vpack.c.b16 %v469, %v467
        %v518 = vpack.c.b16 %v470, %v468
        %v519 = vpack.c.b16 %v473, %v471
        %v520 = vpack.c.b16 %v474, %v472
        %v521 = vpack.c.b16 %v477, %v475
        %v522 = vpack.c.b16 %v478, %v476
        %v523 = vpack.c.b16 %v481, %v479
        %v524 = vpack.c.b16 %v482, %v480
        %v525 = vpack.c.b16 %v485, %v483
        %v526 = vpack.c.b16 %v486, %v484
        %v527 = vpack.c.b16 %v489, %v487
        %v528 = vpack.c.b16 %v490, %v488
        %v529 = vpack.c.b16 %v493, %v491
        %v530 = vpack.c.b16 %v494, %v492
        %v531 = vpack.c.b16 %v497, %v495
        %v532 = vpack.c.b16 %v498, %v496
        %v533 = vpack.c.b16 %v501, %v499
        %v534 = vpack.c.b16 %v502, %v500
        %v599 = vunpack.c.l.b16 %v375
        %v600 = vunpack.c.l.b16 %v376
        %v601 = vunpack.c.l.b16 %v377
        %v602 = vunpack.c.l.b16 %v378
        %v603 = vunpack.c.l.b16 %v379
        %v604 = vunpack.c.l.b16 %v380
        %v605 = vunpack.c.l.b16 %v381
        %v606 = vunpack.c.l.b16 %v382
        %v607 = vunpack.c.l.b16 %v383
        %v608 = vunpack.c.l.b16 %v384
        %v609 = vunpack.c.l.b16 %v385
        %v610 = vunpack.c.l.b16 %v386
        %v611 = vunpack.c.l.b16 %v387
        %v612 = vunpack.c.l.b16 %v388
        %v613 = vunpack.c.l.b16 %v389
        %v614 = vunpack.c.l.b16 %v390
        %v615 = vunpack.c.l.b16 %v391
        %v616 = vunpack.c.l.b16 %v392
        %v617 = vunpack.c.l.b16 %v393
        %v618 = vunpack.c.l.b16 %v394
        %v619 = vunpack.c.l.b16 %v395
        %v620 = vunpack.c.l.b16 %v396
        %v621 = vunpack.c.l.b16 %v397
        %v622 = vunpack.c.l.b16 %v398
        %v623 = vunpack.c.l.b16 %v399
        %v624 = vunpack.c.l.b16 %v400
        %v625 = vunpack.c.l.b16 %v401
        %v626 = vunpack.c.l.b16 %v402
        %v627 = vunpack.c.l.b16 %v403
        %v628 = vunpack.c.l.b16 %v404
        %v629 = vunpack.c.l.b16 %v405
        %v630 = vunpack.c.l.b16 %v406
        %v631 = vpack.c.b16 %v600, %v599
        %v632 = vpack.c.b16 %v602, %v601
        %v633 = vpack.c.b16 %v604, %v603
        %v634 = vpack.c.b16 %v606, %v605
        %v635 = vpack.c.b16 %v608, %v607
        %v636 = vpack.c.b16 %v610, %v609
        %v637 = vpack.c.b16 %v612, %v611
        %v638 = vpack.c.b16 %v614, %v613
        %v639 = vpack.c.b16 %v616, %v615
        %v640 = vpack.c.b16 %v618, %v617
        %v641 = vpack.c.b16 %v620, %v619
        %v642 = vpack.c.b16 %v622, %v621
        %v643 = vpack.c.b16 %v624, %v623
        %v644 = vpack.c.b16 %v626, %v625
        %v645 = vpack.c.b16 %v628, %v627
        %v646 = vpack.c.b16 %v630, %v629
        %663 = vmatprep.subr.bf16.mxu0 0
        %664 = vmatpush1.bf16.msra.mxu0 %v631
        %665 = vmatprep.subr.bf16.mxu0 0
        %666 = vmatpush1.bf16.msra.mxu0 %v632
        %667 = vmatprep.subr.bf16.mxu0 0
        %668 = vmatpush1.bf16.msra.mxu0 %v633
        %669 = vmatprep.subr.bf16.mxu0 0
        %670 = vmatpush1.bf16.msra.mxu0 %v634
        %671 = vmatprep.subr.bf16.mxu0 0
        %672 = vmatpush1.bf16.msra.mxu0 %v635
        %673 = vmatprep.subr.bf16.mxu0 0
        %674 = vmatpush1.bf16.msra.mxu0 %v636
        %675 = vmatprep.subr.bf16.mxu0 0
        %676 = vmatpush1.bf16.msra.mxu0 %v637
        %677 = vmatprep.subr.bf16.mxu0 0
        %678 = vmatpush1.bf16.msra.mxu0 %v638
        %679 = vmatprep.subr.bf16.mxu0 0
        %680 = vmatpush1.bf16.msra.mxu0 %v639
        %681 = vmatprep.subr.bf16.mxu0 0
        %682 = vmatpush1.bf16.msra.mxu0 %v640
        %683 = vmatprep.subr.bf16.mxu0 0
        %684 = vmatpush1.bf16.msra.mxu0 %v641
        %685 = vmatprep.subr.bf16.mxu0 0
        %686 = vmatpush1.bf16.msra.mxu0 %v642
        %687 = vmatprep.subr.bf16.mxu0 0
        %688 = vmatpush1.bf16.msra.mxu0 %v643
        %689 = vmatprep.subr.bf16.mxu0 0
        %690 = vmatpush1.bf16.msra.mxu0 %v644
        %691 = vmatprep.subr.bf16.mxu0 0
        %692 = vmatpush1.bf16.msra.mxu0 %v645
        %693 = vmatprep.subr.bf16.mxu0 0
        %694 = vmatpush1.bf16.msra.mxu0 %v646
        %695 = vmatprep.mubr.bf16.mxu0 %v504
        %696 = vmatmul.mubr.bf16.gmra.mrb[0].mxu0 %v503
        %v697 = vpop.f32.mrb[0].mxu0
        %v698 = vadd.f32 0.0, %v697
        %v699 = vpop.f32.mrb[0].mxu0
        %v700 = vpop.f32.mrb[0].mxu0
        %v701 = vadd.f32 0.0, %v700
        %v702 = vpop.f32.mrb[0].mxu0
        %703 = vmatprep.mubr.bf16.mxu0 %v506
        %704 = vmatmul.mubr.bf16.gmra.mrb[0].mxu0 %v505
        %v705 = vpop.f32.mrb[0].mxu0
        %v706 = vadd.f32 0.0, %v705
        %v707 = vpop.f32.mrb[0].mxu0
        %v708 = vpop.f32.mrb[0].mxu0
        %v709 = vadd.f32 0.0, %v708
        %v710 = vpop.f32.mrb[0].mxu0
        %711 = vmatprep.mubr.bf16.mxu0 %v508
        %712 = vmatmul.mubr.bf16.gmra.mrb[0].mxu0 %v507
        %v713 = vpop.f32.mrb[0].mxu0
        %v714 = vadd.f32 0.0, %v713
        %v715 = vpop.f32.mrb[0].mxu0
        %v716 = vpop.f32.mrb[0].mxu0
        %v717 = vadd.f32 0.0, %v716
        %v718 = vpop.f32.mrb[0].mxu0
        %719 = vmatprep.mubr.bf16.mxu0 %v510
        %720 = vmatmul.mubr.bf16.gmra.mrb[0].mxu0 %v509
        %v721 = vpop.f32.mrb[0].mxu0
        %v722 = vadd.f32 0.0, %v721
        %v723 = vpop.f32.mrb[0].mxu0
        %v724 = vpop.f32.mrb[0].mxu0
        %v725 = vadd.f32 0.0, %v724
        %v726 = vpop.f32.mrb[0].mxu0
        %727 = vmatprep.mubr.bf16.mxu0 %v512
        %728 = vmatmul.mubr.bf16.gmra.mrb[0].mxu0 %v511
        %v729 = vpop.f32.mrb[0].mxu0
        %v730 = vadd.f32 0.0, %v729
        %v731 = vpop.f32.mrb[0].mxu0
        %v732 = vpop.f32.mrb[0].mxu0
        %v733 = vadd.f32 0.0, %v732
        %v734 = vpop.f32.mrb[0].mxu0
        %735 = vmatprep.mubr.bf16.mxu0 %v514
        %736 = vmatmul.mubr.bf16.gmra.mrb[0].mxu0 %v513
        %v737 = vpop.f32.mrb[0].mxu0
        %v738 = vadd.f32 0.0, %v737
        %v739 = vpop.f32.mrb[0].mxu0
        %v740 = vpop.f32.mrb[0].mxu0
        %v741 = vadd.f32 0.0, %v740
        %v742 = vpop.f32.mrb[0].mxu0
        %743 = vmatprep.mubr.bf16.mxu0 %v516
        %744 = vmatmul.mubr.bf16.gmra.mrb[0].mxu0 %v515
        %v745 = vpop.f32.mrb[0].mxu0
        %v746 = vadd.f32 0.0, %v745
        %v747 = vpop.f32.mrb[0].mxu0
        %v748 = vpop.f32.mrb[0].mxu0
        %v749 = vadd.f32 0.0, %v748
        %v750 = vpop.f32.mrb[0].mxu0
        %751 = vmatprep.mubr.bf16.mxu0 %v518
        %752 = vmatmul.mubr.bf16.gmra.mrb[0].mxu0 %v517
        %v753 = vpop.f32.mrb[0].mxu0
        %v754 = vadd.f32 0.0, %v753
        %v755 = vpop.f32.mrb[0].mxu0
        %v756 = vpop.f32.mrb[0].mxu0
        %v757 = vadd.f32 0.0, %v756
        %v758 = vpop.f32.mrb[0].mxu0
        %759 = vmatprep.mubr.bf16.mxu0 %v520
        %760 = vmatmul.mubr.bf16.gmra.mrb[0].mxu0 %v519
        %v761 = vpop.f32.mrb[0].mxu0
        %v762 = vadd.f32 0.0, %v761
        %v763 = vpop.f32.mrb[0].mxu0
        %v764 = vpop.f32.mrb[0].mxu0
        %v765 = vadd.f32 0.0, %v764
        %v766 = vpop.f32.mrb[0].mxu0
        %767 = vmatprep.mubr.bf16.mxu0 %v522
        %768 = vmatmul.mubr.bf16.gmra.mrb[0].mxu0 %v521
        %v769 = vpop.f32.mrb[0].mxu0
        %v770 = vadd.f32 0.0, %v769
        %v771 = vpop.f32.mrb[0].mxu0
        %v772 = vpop.f32.mrb[0].mxu0
        %v773 = vadd.f32 0.0, %v772
        %v774 = vpop.f32.mrb[0].mxu0
        %775 = vmatprep.mubr.bf16.mxu0 %v524
        %776 = vmatmul.mubr.bf16.gmra.mrb[0].mxu0 %v523
        %v777 = vpop.f32.mrb[0].mxu0
        %v778 = vadd.f32 0.0, %v777
        %v779 = vpop.f32.mrb[0].mxu0
        %v780 = vpop.f32.mrb[0].mxu0
        %v781 = vadd.f32 0.0, %v780
        %v782 = vpop.f32.mrb[0].mxu0
        %783 = vmatprep.mubr.bf16.mxu0 %v526
        %784 = vmatmul.mubr.bf16.gmra.mrb[0].mxu0 %v525
        %v785 = vpop.f32.mrb[0].mxu0
        %v786 = vadd.f32 0.0, %v785
        %v787 = vpop.f32.mrb[0].mxu0
        %v788 = vpop.f32.mrb[0].mxu0
        %v789 = vadd.f32 0.0, %v788
        %v790 = vpop.f32.mrb[0].mxu0
        %791 = vmatprep.mubr.bf16.mxu0 %v528
        %792 = vmatmul.mubr.bf16.gmra.mrb[0].mxu0 %v527
        %v793 = vpop.f32.mrb[0].mxu0
        %v794 = vadd.f32 0.0, %v793
        %v795 = vpop.f32.mrb[0].mxu0
        %v796 = vpop.f32.mrb[0].mxu0
        %v797 = vadd.f32 0.0, %v796
        %v798 = vpop.f32.mrb[0].mxu0
        %799 = vmatprep.mubr.bf16.mxu0 %v530
        %800 = vmatmul.mubr.bf16.gmra.mrb[0].mxu0 %v529
        %v801 = vpop.f32.mrb[0].mxu0
        %v802 = vadd.f32 0.0, %v801
        %v803 = vpop.f32.mrb[0].mxu0
        %v804 = vpop.f32.mrb[0].mxu0
        %v805 = vadd.f32 0.0, %v804
        %v806 = vpop.f32.mrb[0].mxu0
        %807 = vmatprep.mubr.bf16.mxu0 %v532
        %808 = vmatmul.mubr.bf16.gmra.mrb[0].mxu0 %v531
        %v809 = vpop.f32.mrb[0].mxu0
        %v810 = vadd.f32 0.0, %v809
        %v811 = vpop.f32.mrb[0].mxu0
        %v812 = vpop.f32.mrb[0].mxu0
        %v813 = vadd.f32 0.0, %v812
        %v814 = vpop.f32.mrb[0].mxu0
        %815 = vmatprep.mubr.bf16.mxu0 %v534
        %816 = vmatmul.mubr.bf16.gmra.mrb[0].mxu0 %v533
        %v817 = vpop.f32.mrb[0].mxu0
        %v818 = vadd.f32 0.0, %v817
        %v819 = vpop.f32.mrb[0].mxu0
        %v820 = vpop.f32.mrb[0].mxu0
        %v821 = vadd.f32 0.0, %v820
        %v822 = vpop.f32.mrb[0].mxu0
        %823 = vdwg.mxu0
        %v824 = vadd.f32 %v311, %v698
        %v825 = vadd.f32 %v312, %v701
        %v826 = vadd.f32 %v313, %v706
        %v827 = vadd.f32 %v314, %v709
        %v828 = vadd.f32 %v315, %v714
        %v829 = vadd.f32 %v316, %v717
        %v830 = vadd.f32 %v317, %v722
        %v831 = vadd.f32 %v318, %v725
        %v832 = vadd.f32 %v319, %v730
        %v833 = vadd.f32 %v320, %v733
        %v834 = vadd.f32 %v321, %v738
        %v835 = vadd.f32 %v322, %v741
        %v836 = vadd.f32 %v323, %v746
        %v837 = vadd.f32 %v324, %v749
        %v838 = vadd.f32 %v325, %v754
        %v839 = vadd.f32 %v326, %v757
        %v840 = vadd.f32 %v327, %v762
        %v841 = vadd.f32 %v328, %v765
        %v842 = vadd.f32 %v329, %v770
        %v843 = vadd.f32 %v330, %v773
        %v844 = vadd.f32 %v331, %v778
        %v845 = vadd.f32 %v332, %v781
        %v846 = vadd.f32 %v333, %v786
        %v847 = vadd.f32 %v334, %v789
        %v848 = vadd.f32 %v335, %v794
        %v849 = vadd.f32 %v336, %v797
        %v850 = vadd.f32 %v337, %v802
        %v851 = vadd.f32 %v338, %v805
        %v852 = vadd.f32 %v339, %v810
        %v853 = vadd.f32 %v340, %v813
        %v854 = vadd.f32 %v341, %v818
        %v855 = vadd.f32 %v342, %v821
        %vm856 = vcmask 523264
        %857 = vst.msk [vmem:[#allocation2] sm:$0xff] %vm856, %v824
        %858 = vst.msk [vmem:[#allocation2 + $0x8] sm:$0xff] %vm856, %v825
        %859 = vst.msk [vmem:[#allocation2 + $0x10] sm:$0xff] %vm856, %v826
        %860 = vst.msk [vmem:[#allocation2 + $0x18] sm:$0xff] %vm856, %v827
        %861 = vst.msk [vmem:[#allocation2 + $0x20] sm:$0xff] %vm856, %v828
        %862 = vst.msk [vmem:[#allocation2 + $0x28] sm:$0xff] %vm856, %v829
        %863 = vst.msk [vmem:[#allocation2 + $0x30] sm:$0xff] %vm856, %v830
        %864 = vst.msk [vmem:[#allocation2 + $0x38] sm:$0xff] %vm856, %v831
        %865 = vst.msk [vmem:[#allocation2 + $0x40] sm:$0xff] %vm856, %v832
        %866 = vst.msk [vmem:[#allocation2 + $0x48] sm:$0xff] %vm856, %v833
        %867 = vst.msk [vmem:[#allocation2 + $0x50] sm:$0xff] %vm856, %v834
        %868 = vst.msk [vmem:[#allocation2 + $0x58] sm:$0xff] %vm856, %v835
        %869 = vst.msk [vmem:[#allocation2 + $0x60] sm:$0xff] %vm856, %v836
        %870 = vst.msk [vmem:[#allocation2 + $0x68] sm:$0xff] %vm856, %v837
        %871 = vst.msk [vmem:[#allocation2 + $0x70] sm:$0xff] %vm856, %v838
        %872 = vst.msk [vmem:[#allocation2 + $0x78] sm:$0xff] %vm856, %v839
        %873 = vst.msk [vmem:[#allocation2 + $0x80] sm:$0xff] %vm856, %v840
        %874 = vst.msk [vmem:[#allocation2 + $0x88] sm:$0xff] %vm856, %v841
        %875 = vst.msk [vmem:[#allocation2 + $0x90] sm:$0xff] %vm856, %v842
        %876 = vst.msk [vmem:[#allocation2 + $0x98] sm:$0xff] %vm856, %v843
        %877 = vst.msk [vmem:[#allocation2 + $0xa0] sm:$0xff] %vm856, %v844
        %878 = vst.msk [vmem:[#allocation2 + $0xa8] sm:$0xff] %vm856, %v845
        %879 = vst.msk [vmem:[#allocation2 + $0xb0] sm:$0xff] %vm856, %v846
        %880 = vst.msk [vmem:[#allocation2 + $0xb8] sm:$0xff] %vm856, %v847
        %881 = vst.msk [vmem:[#allocation2 + $0xc0] sm:$0xff] %vm856, %v848
        %882 = vst.msk [vmem:[#allocation2 + $0xc8] sm:$0xff] %vm856, %v849
        %883 = vst.msk [vmem:[#allocation2 + $0xd0] sm:$0xff] %vm856, %v850
        %884 = vst.msk [vmem:[#allocation2 + $0xd8] sm:$0xff] %vm856, %v851
        %885 = vst.msk [vmem:[#allocation2 + $0xe0] sm:$0xff] %vm856, %v852
        %886 = vst.msk [vmem:[#allocation2 + $0xe8] sm:$0xff] %vm856, %v853
        %887 = vst.msk [vmem:[#allocation2 + $0xf0] sm:$0xff] %vm856, %v854
        %888 = vst.msk [vmem:[#allocation2 + $0xf8] sm:$0xff] %vm856, %v855
        // Predicated region
        $region41: #{tpu_custom_call.1} parent=31 // pred_check
          %p889 = pneg %p274
        $region42: #{tpu_custom_call.1} parent=31 // pred_check_branch
          %891 = sbr.rel (%p889) target = $region44
        $region43: #{tpu_custom_call.1} parent=31 // pred_region
          %v892 = vld [vmem:[#allocation2] sm:$0xff]
          %v893 = vld [vmem:[#allocation2 + $0x8] sm:$0xff]
          %v894 = vld [vmem:[#allocation2 + $0x10] sm:$0xff]
          %v895 = vld [vmem:[#allocation2 + $0x18] sm:$0xff]
          %v896 = vld [vmem:[#allocation2 + $0x20] sm:$0xff]
          %v897 = vld [vmem:[#allocation2 + $0x28] sm:$0xff]
          %v898 = vld [vmem:[#allocation2 + $0x30] sm:$0xff]
          %v899 = vld [vmem:[#allocation2 + $0x38] sm:$0xff]
          %v900 = vld [vmem:[#allocation2 + $0x40] sm:$0xff]
          %v901 = vld [vmem:[#allocation2 + $0x48] sm:$0xff]
          %v902 = vld [vmem:[#allocation2 + $0x50] sm:$0xff]
          %v903 = vld [vmem:[#allocation2 + $0x58] sm:$0xff]
          %v904 = vld [vmem:[#allocation2 + $0x60] sm:$0xff]
          %v905 = vld [vmem:[#allocation2 + $0x68] sm:$0xff]
          %v906 = vld [vmem:[#allocation2 + $0x70] sm:$0xff]
          %v907 = vld [vmem:[#allocation2 + $0x78] sm:$0xff]
          %v908 = vld [vmem:[#allocation2 + $0x80] sm:$0xff]
          %v909 = vld [vmem:[#allocation2 + $0x88] sm:$0xff]
          %v910 = vld [vmem:[#allocation2 + $0x90] sm:$0xff]
          %v911 = vld [vmem:[#allocation2 + $0x98] sm:$0xff]
          %v912 = vld [vmem:[#allocation2 + $0xa0] sm:$0xff]
          %v913 = vld [vmem:[#allocation2 + $0xa8] sm:$0xff]
          %v914 = vld [vmem:[#allocation2 + $0xb0] sm:$0xff]
          %v915 = vld [vmem:[#allocation2 + $0xb8] sm:$0xff]
          %v916 = vld [vmem:[#allocation2 + $0xc0] sm:$0xff]
          %v917 = vld [vmem:[#allocation2 + $0xc8] sm:$0xff]
          %v918 = vld [vmem:[#allocation2 + $0xd0] sm:$0xff]
          %v919 = vld [vmem:[#allocation2 + $0xd8] sm:$0xff]
          %v920 = vld [vmem:[#allocation2 + $0xe0] sm:$0xff]
          %v921 = vld [vmem:[#allocation2 + $0xe8] sm:$0xff]
          %v922 = vld [vmem:[#allocation2 + $0xf0] sm:$0xff]
          %v923 = vld [vmem:[#allocation2 + $0xf8] sm:$0xff]
          %v924 = vld [vmem:[%s263] sm:$0x1]
          %v926 = vlaneseq
          %v927 = vshrl.u32 %v926, 7
          %v928 = vsub.s32 0, %v927
          %v929 = vrot.slane %v924, %v928
          %v931 = vadd.f32 %v892, %v929
          %v932 = vadd.f32 %v893, %v929
          %v933 = vadd.f32 %v894, %v929
          %v934 = vadd.f32 %v895, %v929
          %v935 = vadd.f32 %v896, %v929
          %v936 = vadd.f32 %v897, %v929
          %v937 = vadd.f32 %v898, %v929
          %v938 = vadd.f32 %v899, %v929
          %v939 = vadd.f32 %v900, %v929
          %v940 = vadd.f32 %v901, %v929
          %v941 = vadd.f32 %v902, %v929
          %v942 = vadd.f32 %v903, %v929
          %v943 = vadd.f32 %v904, %v929
          %v944 = vadd.f32 %v905, %v929
          %v945 = vadd.f32 %v906, %v929
          %v946 = vadd.f32 %v907, %v929
          %v947 = vadd.f32 %v908, %v929
          %v948 = vadd.f32 %v909, %v929
          %v949 = vadd.f32 %v910, %v929
          %v950 = vadd.f32 %v911, %v929
          %v951 = vadd.f32 %v912, %v929
          %v952 = vadd.f32 %v913, %v929
          %v953 = vadd.f32 %v914, %v929
          %v954 = vadd.f32 %v915, %v929
          %v955 = vadd.f32 %v916, %v929
          %v956 = vadd.f32 %v917, %v929
          %v957 = vadd.f32 %v918, %v929
          %v958 = vadd.f32 %v919, %v929
          %v959 = vadd.f32 %v920, %v929
          %v960 = vadd.f32 %v921, %v929
          %v961 = vadd.f32 %v922, %v929
          %v962 = vadd.f32 %v923, %v929
          %v963 = vmax.f32 %v931, 0.0
          %v964 = vmax.f32 %v932, 0.0
          %v965 = vmax.f32 %v933, 0.0
          %v966 = vmax.f32 %v934, 0.0
          %v967 = vmax.f32 %v935, 0.0
          %v968 = vmax.f32 %v936, 0.0
          %v969 = vmax.f32 %v937, 0.0
          %v970 = vmax.f32 %v938, 0.0
          %v971 = vmax.f32 %v939, 0.0
          %v972 = vmax.f32 %v940, 0.0
          %v973 = vmax.f32 %v941, 0.0
          %v974 = vmax.f32 %v942, 0.0
          %v975 = vmax.f32 %v943, 0.0
          %v976 = vmax.f32 %v944, 0.0
          %v977 = vmax.f32 %v945, 0.0
          %v978 = vmax.f32 %v946, 0.0
          %v979 = vmax.f32 %v947, 0.0
          %v980 = vmax.f32 %v948, 0.0
          %v981 = vmax.f32 %v949, 0.0
          %v982 = vmax.f32 %v950, 0.0
          %v983 = vmax.f32 %v951, 0.0
          %v984 = vmax.f32 %v952, 0.0
          %v985 = vmax.f32 %v953, 0.0
          %v986 = vmax.f32 %v954, 0.0
          %v987 = vmax.f32 %v955, 0.0
          %v988 = vmax.f32 %v956, 0.0
          %v989 = vmax.f32 %v957, 0.0
          %v990 = vmax.f32 %v958, 0.0
          %v991 = vmax.f32 %v959, 0.0
          %v992 = vmax.f32 %v960, 0.0
          %v993 = vmax.f32 %v961, 0.0
          %v994 = vmax.f32 %v962, 0.0
          %v995 = vpack.c.bf16 %v964, %v963
          %v996 = vpack.c.bf16 %v966, %v965
          %v997 = vpack.c.bf16 %v968, %v967
          %v998 = vpack.c.bf16 %v970, %v969
          %v999 = vpack.c.bf16 %v972, %v971
          %v1000 = vpack.c.bf16 %v974, %v973
          %v1001 = vpack.c.bf16 %v976, %v975
          %v1002 = vpack.c.bf16 %v978, %v977
          %v1003 = vpack.c.bf16 %v980, %v979
          %v1004 = vpack.c.bf16 %v982, %v981
          %v1005 = vpack.c.bf16 %v984, %v983
          %v1006 = vpack.c.bf16 %v986, %v985
          %v1007 = vpack.c.bf16 %v988, %v987
          %v1008 = vpack.c.bf16 %v990, %v989
          %v1009 = vpack.c.bf16 %v992, %v991
          %v1010 = vpack.c.bf16 %v994, %v993
          %v1027 = vunpack.c.l.b16 %v995
          %v1028 = vunpack.c.h.b16 %v995
          %v1029 = vunpack.c.l.b16 %v996
          %v1030 = vunpack.c.h.b16 %v996
          %v1031 = vunpack.c.l.b16 %v997
          %v1032 = vunpack.c.h.b16 %v997
          %v1033 = vunpack.c.l.b16 %v998
          %v1034 = vunpack.c.h.b16 %v998
          %v1035 = vunpack.c.l.b16 %v999
          %v1036 = vunpack.c.h.b16 %v999
          %v1037 = vunpack.c.l.b16 %v1000
          %v1038 = vunpack.c.h.b16 %v1000
          %v1039 = vunpack.c.l.b16 %v1001
          %v1040 = vunpack.c.h.b16 %v1001
          %v1041 = vunpack.c.l.b16 %v1002
          %v1042 = vunpack.c.h.b16 %v1002
          %v1043 = vunpack.c.l.b16 %v1003
          %v1044 = vunpack.c.h.b16 %v1003
          %v1045 = vunpack.c.l.b16 %v1004
          %v1046 = vunpack.c.h.b16 %v1004
          %v1047 = vunpack.c.l.b16 %v1005
          %v1048 = vunpack.c.h.b16 %v1005
          %v1049 = vunpack.c.l.b16 %v1006
          %v1050 = vunpack.c.h.b16 %v1006
          %v1051 = vunpack.c.l.b16 %v1007
          %v1052 = vunpack.c.h.b16 %v1007
          %v1053 = vunpack.c.l.b16 %v1008
          %v1054 = vunpack.c.h.b16 %v1008
          %v1055 = vunpack.c.l.b16 %v1009
          %v1056 = vunpack.c.h.b16 %v1009
          %v1057 = vunpack.c.l.b16 %v1010
          %v1058 = vunpack.c.h.b16 %v1010
          %v1059 = vpack.c.b16 %v1027, %v1027
          %v1060 = vpack.c.b16 %v1028, %v1028
          %v1061 = vpack.c.b16 %v1029, %v1029
          %v1062 = vpack.c.b16 %v1030, %v1030
          %v1063 = vpack.c.b16 %v1031, %v1031
          %v1064 = vpack.c.b16 %v1032, %v1032
          %v1065 = vpack.c.b16 %v1033, %v1033
          %v1066 = vpack.c.b16 %v1034, %v1034
          %v1067 = vpack.c.b16 %v1035, %v1035
          %v1068 = vpack.c.b16 %v1036, %v1036
          %v1069 = vpack.c.b16 %v1037, %v1037
          %v1070 = vpack.c.b16 %v1038, %v1038
          %v1071 = vpack.c.b16 %v1039, %v1039
          %v1072 = vpack.c.b16 %v1040, %v1040
          %v1073 = vpack.c.b16 %v1041, %v1041
          %v1074 = vpack.c.b16 %v1042, %v1042
          %v1075 = vpack.c.b16 %v1043, %v1043
          %v1076 = vpack.c.b16 %v1044, %v1044
          %v1077 = vpack.c.b16 %v1045, %v1045
          %v1078 = vpack.c.b16 %v1046, %v1046
          %v1079 = vpack.c.b16 %v1047, %v1047
          %v1080 = vpack.c.b16 %v1048, %v1048
          %v1081 = vpack.c.b16 %v1049, %v1049
          %v1082 = vpack.c.b16 %v1050, %v1050
          %v1083 = vpack.c.b16 %v1051, %v1051
          %v1084 = vpack.c.b16 %v1052, %v1052
          %v1085 = vpack.c.b16 %v1053, %v1053
          %v1086 = vpack.c.b16 %v1054, %v1054
          %v1087 = vpack.c.b16 %v1055, %v1055
          %v1088 = vpack.c.b16 %v1056, %v1056
          %v1089 = vpack.c.b16 %v1057, %v1057
          %v1090 = vpack.c.b16 %v1058, %v1058
          %vm1123 = vcmask 519168
          %1124 = vst.msk [vmem:[%s271] sm:$0xf] %vm1123, %v1059
          %1125 = vst.msk [vmem:[%s271 + $0x4] sm:$0xf] %vm1123, %v1060
          %1126 = vst.msk [vmem:[%s271 + $0x8] sm:$0xf] %vm1123, %v1061
          %1127 = vst.msk [vmem:[%s271 + $0xc] sm:$0xf] %vm1123, %v1062
          %1128 = vst.msk [vmem:[%s271 + $0x10] sm:$0xf] %vm1123, %v1063
          %1129 = vst.msk [vmem:[%s271 + $0x14] sm:$0xf] %vm1123, %v1064
          %1130 = vst.msk [vmem:[%s271 + $0x18] sm:$0xf] %vm1123, %v1065
          %1131 = vst.msk [vmem:[%s271 + $0x1c] sm:$0xf] %vm1123, %v1066
          %1132 = vst.msk [vmem:[%s271 + $0x20] sm:$0xf] %vm1123, %v1067
          %1133 = vst.msk [vmem:[%s271 + $0x24] sm:$0xf] %vm1123, %v1068
          %1134 = vst.msk [vmem:[%s271 + $0x28] sm:$0xf] %vm1123, %v1069
          %1135 = vst.msk [vmem:[%s271 + $0x2c] sm:$0xf] %vm1123, %v1070
          %1136 = vst.msk [vmem:[%s271 + $0x30] sm:$0xf] %vm1123, %v1071
          %1137 = vst.msk [vmem:[%s271 + $0x34] sm:$0xf] %vm1123, %v1072
          %1138 = vst.msk [vmem:[%s271 + $0x38] sm:$0xf] %vm1123, %v1073
          %1139 = vst.msk [vmem:[%s271 + $0x3c] sm:$0xf] %vm1123, %v1074
          %1140 = vst.msk [vmem:[%s271 + $0x40] sm:$0xf] %vm1123, %v1075
          %1141 = vst.msk [vmem:[%s271 + $0x44] sm:$0xf] %vm1123, %v1076
          %1142 = vst.msk [vmem:[%s271 + $0x48] sm:$0xf] %vm1123, %v1077
          %1143 = vst.msk [vmem:[%s271 + $0x4c] sm:$0xf] %vm1123, %v1078
          %1144 = vst.msk [vmem:[%s271 + $0x50] sm:$0xf] %vm1123, %v1079
          %1145 = vst.msk [vmem:[%s271 + $0x54] sm:$0xf] %vm1123, %v1080
          %1146 = vst.msk [vmem:[%s271 + $0x58] sm:$0xf] %vm1123, %v1081
          %1147 = vst.msk [vmem:[%s271 + $0x5c] sm:$0xf] %vm1123, %v1082
          %1148 = vst.msk [vmem:[%s271 + $0x60] sm:$0xf] %vm1123, %v1083
          %1149 = vst.msk [vmem:[%s271 + $0x64] sm:$0xf] %vm1123, %v1084
          %1150 = vst.msk [vmem:[%s271 + $0x68] sm:$0xf] %vm1123, %v1085
          %1151 = vst.msk [vmem:[%s271 + $0x6c] sm:$0xf] %vm1123, %v1086
          %1152 = vst.msk [vmem:[%s271 + $0x70] sm:$0xf] %vm1123, %v1087
          %1153 = vst.msk [vmem:[%s271 + $0x74] sm:$0xf] %vm1123, %v1088
          %1154 = vst.msk [vmem:[%s271 + $0x78] sm:$0xf] %vm1123, %v1089
          %1155 = vst.msk [vmem:[%s271 + $0x7c] sm:$0xf] %vm1123, %v1090
        $region44: #{tpu_custom_call.1} parent=31 // pred_fallthru
          _
        %s1156 = smul.u32 32, %s23
        %p1157 = scmp.lt.s32.totalorder %s1156, 63
        %s1158 = scalar_select %p1157, %s1156, 63
        %p1159 = scmp.lt.s32.totalorder %s22, 0
        %s1160 = scalar_select %p1159, %s22, 0
        %s1161 = sadd.s32 %s1160, %s1158
        %s1162 = smul.addr %s1161, 4
        %s1163 = scalar_lea.vmem %s3, %s1162
        // Predicated region
        $region45: #{tpu_custom_call.1} parent=31 // pred_check
          %p1164 = pneg %p138
        $region46: #{tpu_custom_call.1} parent=31 // pred_check_branch
          %1166 = sbr.rel (%p1164) target = $region48
        $region47: #{tpu_custom_call.1} parent=31 // pred_region
          %s1167 = smul.u32 32, %s23
        $region48: #{tpu_custom_call.1} parent=31 // pred_fallthru
          _
      $region32: #{tpu_custom_call.1} parent=5 // pred_fallthru
        _
      %p1168 = scmp.le.s32.totalorder 2, %s12
      // Predicated region
      $region49: #{tpu_custom_call.1} parent=5 // pred_check
        %p1169 = pneg %p1168
      $region50: #{tpu_custom_call.1} parent=5 // pred_check_branch
        %1171 = sbr.rel (%p1169) target = $region52
      $region51: #{tpu_custom_call.1} parent=5 // pred_region
        %s1172 = ssub.s32 %s12, 2
        // Predicated region
        $region53: #{tpu_custom_call.1} parent=51 // pred_check
          %p1173 = pneg %p144
        $region54: #{tpu_custom_call.1} parent=51 // pred_check_branch
          %1175 = sbr.rel (%p1173) target = $region56
        $region55: #{tpu_custom_call.1} parent=51 // pred_region
          %s1176 = smul.u32 32, %s26
          %p1177 = scmp.lt.s32.totalorder %s1176, 63
          %s1178 = scalar_select %p1177, %s1176, 63
          %p1179 = scmp.lt.s32.totalorder %s25, 0
          %s1180 = scalar_select %p1179, %s25, 0
          %s1181 = sadd.s32 %s1180, %s1178
          %s1182 = smul.addr %s1181, 4
          %s1183 = scalar_lea.vmem %s3, %s1182
        $region56: #{tpu_custom_call.1} parent=51 // pred_fallthru
          _
      $region52: #{tpu_custom_call.1} parent=5 // pred_fallthru
        _
    $region6: #{tpu_custom_call.1} parent=1 // loop_footer
      %s16 = sadd.s32 1, %s12
    $region7: #{tpu_custom_call.1} parent=1 // loop_footer_branch
      %11 = sbr.rel target = $region3
    $region8: #{tpu_custom_call.1} parent=1 // loop_exit
      _
    %1184 = vsyncpa [#allocation4], 1
    %s1185 = scalar_lea.sflag [#allocation4], 1
    %1186 = vsyncpa %s1185, 1

</llo_original>
